<compile_context>
chip_gen: v7x
topology: tpu7x:2x2x1
jax: 0.10.0
libtpu: 0.0.40
codegen_flags: <defaults>
</compile_context>

<pallas_src>
import functools

import jax
import jax.numpy as jnp
from jax import lax
from jax.experimental import pallas as pl
from jax.experimental.pallas import tpu as pltpu


def _lap_kernel(m_ref, x_ref, o_ref, *, W):
    """2 * depthwise-3x3-Laplacian (zero padding) on flattened (NC, L) images.

    m_ref: VMEM (4, L) f32  boundary-validity masks as 0/1 floats:
           [col >= 1, col <= W-2, row >= 1, row <= H-2]
    x_ref: VMEM (NC, L) f32  all (batch, channel) images on the sublane axis,
           spatial dims flattened to lanes (L = H*W padded to a mult. of 128).
    o_ref: VMEM (NC, L) f32
    """
    x = x_ref[...]                       # (NC, L)
    m = m_ref[...]                       # (4, L)
    L = x.shape[-1]
    m_left, m_right, m_up, m_down = m[0:1], m[1:2], m[2:3], m[3:4]   # (1, L)

    # Separable 3x3 window sum (Laplacian == 9*x - window_sum); zero padding is
    # enforced by multiplying each shifted operand with its validity mask.
    # pltpu.roll(x, k)[p] == x[(p - k) % L]  =>  x[p + s] == roll(x, (-s) % L).
    col_sum = (m_left * pltpu.roll(x, 1, axis=1)           # x[p - 1]
               + x
               + m_right * pltpu.roll(x, L - 1, axis=1))   # x[p + 1]
    win = (m_up * pltpu.roll(col_sum, W, axis=1)            # col_sum[p - W]
           + col_sum
           + m_down * pltpu.roll(col_sum, L - W, axis=1))   # col_sum[p + W]

    # conv(Laplacian) * 2  ==  2 * (9*x - win)  ==  18*x - 2*win
    o_ref[...] = (18.0 * x - 2.0 * win).astype(o_ref.dtype)


def new_gauss_forward(x):
    """x: (N, 3, H, W) f32, NCHW contiguous.

    Returns (x, x22) matching the PyTorch module:
        x22 = conv2d(x, fixed_laplacian_3x3, stride=1, padding=1, groups=3) * 2
    """
    N, C, H, W = x.shape
    assert C == 3, "New_Gauss uses groups=3 with a fixed 3-channel kernel"
    assert H >= 2 and W >= 2, "kernel assumes at least a 2x2 image"

    L = H * W
    Lp = ((L + 127) // 128) * 128        # keep lane axis a multiple of 128
    NC = N * C

    xf = x.reshape(NC, L)                # layout-free reshape (NCHW contiguous)
    if Lp != L:
        xf = jnp.pad(xf, ((0, 0), (0, Lp - L)))

    # Tiny per-position boundary masks, built once outside the kernel
    # (positions in the lane pad, if any, are discarded after the kernel).
    pos = jnp.arange(Lp, dtype=jnp.int32)
    row = pos // W
    col = pos - row * W
    masks = jnp.stack(
        [(col >= 1).astype(x.dtype),         # source col offset -1 valid
         (col <= W - 2).astype(x.dtype),     # source col offset +1 valid
         (row >= 1).astype(x.dtype),         # source row offset -1 valid
         (row <= H - 2).astype(x.dtype)],    # source row offset +1 valid
        axis=0)                              # (4, Lp)

    # NOTE: whole-image blocks are fine at these sizes; for very large images
    # (double-buffered in+out VMEM ~ 4 * NC * Lp * 4B approaching the scoped
    # limit — 64 MiB physical on v7x, raiseable toward 128 MiB via
    # vmem_limit_bytes on v5e/v6e) tile the NC and/or row axis with a 1-row
    # halo instead of using a single full block.
    out = pl.pallas_call(
        functools.partial(_lap_kernel, W=W),
        out_shape=jax.ShapeDtypeStruct((NC, Lp), x.dtype),
        grid=(1,),
        in_specs=[
            pl.BlockSpec((4, Lp), lambda i: (0, 0)),     # masks (one tiny DMA)
            pl.BlockSpec((NC, Lp), lambda i: (0, 0)),    # all images, one DMA
        ],
        out_specs=pl.BlockSpec((NC, Lp), lambda i: (0, 0)),
    )(masks, xf)

    x22 = out[:, :L].reshape(N, C, H, W)
    return x, x22


def _laplacian_weight(dtype=jnp.float32):
    k3 = jnp.array([[-1.0, -1.0, -1.0],
                    [-1.0,  8.0, -1.0],
                    [-1.0, -1.0, -1.0]], dtype=dtype)
    return jnp.stack([k3, k3, k3], axis=0)[:, None, :, :]    # (3, 1, 3, 3)


def _reference(x):
    y = lax.conv_general_dilated(
        x, _laplacian_weight(x.dtype),
        window_strides=(1, 1),
        padding=((1, 1), (1, 1)),
        feature_group_count=x.shape[1],
        dimension_numbers=("NCHW", "OIHW", "NCHW"),
    )
    return y * 2.0


if __name__ == "__main__":
    key = jax.random.PRNGKey(0)
    N, C, H, Wd = 2, 3, 16, 16          # groups=3 requires 3 input channels
    x = jax.random.normal(key, (N, C, H, Wd), dtype=jnp.float32)

    x_out, x22 = new_gauss_forward(x)
    x_out = jax.block_until_ready(x_out)
    x22 = jax.block_until_ready(x22)

    ref = jax.block_until_ready(_reference(x))
    assert x_out.shape == (N, C, H, Wd) and x22.shape == (N, C, H, Wd)
    assert jnp.allclose(x_out, x)
    assert jnp.allclose(x22, ref, atol=1e-4, rtol=1e-5)

    print("KERNEL_OK")
</pallas_src>

<mosaic_0001>
module attributes {stable_mosaic.version = 11 : i64} {
  func.func @_lap_kernel(%arg0: i32, %arg1: memref<4x256xf32, #tpu.memory_space<vmem>>, %arg2: memref<6x256xf32, #tpu.memory_space<vmem>>, %arg3: memref<6x256xf32, #tpu.memory_space<vmem>>) attributes {dimension_semantics = [#tpu.dimension_semantics<arbitrary>], iteration_bounds = array<i64: 1>, scalar_prefetch = 0 : i64, scratch_operands = 0 : i64, tpu.core_type = #tpu.core_type<tc>, window_params = [{pipeline_mode = #tpu.pipeline_mode<synchronous>, transform_indices = @transform_0, window_bounds = array<i64: 4, 256>}, {pipeline_mode = #tpu.pipeline_mode<synchronous>, transform_indices = @transform_1, window_bounds = array<i64: 6, 256>}, {pipeline_mode = #tpu.pipeline_mode<synchronous>, transform_indices = @transform_2, window_bounds = array<i64: 6, 256>}]} {
    %c0 = arith.constant 0 : index
    %c0_0 = arith.constant 0 : index
    %0 = vector.load %arg2[%c0, %c0_0] : memref<6x256xf32, #tpu.memory_space<vmem>>, vector<6x256xf32>
    %c0_1 = arith.constant 0 : index
    %c0_2 = arith.constant 0 : index
    %1 = vector.load %arg1[%c0_1, %c0_2] : memref<4x256xf32, #tpu.memory_space<vmem>>, vector<4x256xf32>
    %2 = vector.extract_strided_slice %1 {offsets = [0, 0], sizes = [1, 256], strides = [1, 1]} : vector<4x256xf32> to vector<1x256xf32>
    %3 = vector.extract_strided_slice %1 {offsets = [1, 0], sizes = [1, 256], strides = [1, 1]} : vector<4x256xf32> to vector<1x256xf32>
    %4 = vector.extract_strided_slice %1 {offsets = [2, 0], sizes = [1, 256], strides = [1, 1]} : vector<4x256xf32> to vector<1x256xf32>
    %5 = vector.extract_strided_slice %1 {offsets = [3, 0], sizes = [1, 256], strides = [1, 1]} : vector<4x256xf32> to vector<1x256xf32>
    %c1_i32 = arith.constant 1 : i32
    %6 = tpu.dynamic_rotate %0 by %c1_i32 dim 1 : vector<6x256xf32>, i32 -> vector<6x256xf32>
    %7 = vector.broadcast %2 : vector<1x256xf32> to vector<6x256xf32>
    %8 = arith.mulf %7, %6 : vector<6x256xf32>
    %9 = arith.addf %8, %0 : vector<6x256xf32>
    %c255_i32 = arith.constant 255 : i32
    %10 = tpu.dynamic_rotate %0 by %c255_i32 dim 1 : vector<6x256xf32>, i32 -> vector<6x256xf32>
    %11 = vector.broadcast %3 : vector<1x256xf32> to vector<6x256xf32>
    %12 = arith.mulf %11, %10 : vector<6x256xf32>
    %13 = arith.addf %9, %12 : vector<6x256xf32>
    %c16_i32 = arith.constant 16 : i32
    %14 = tpu.dynamic_rotate %13 by %c16_i32 dim 1 : vector<6x256xf32>, i32 -> vector<6x256xf32>
    %15 = vector.broadcast %4 : vector<1x256xf32> to vector<6x256xf32>
    %16 = arith.mulf %15, %14 : vector<6x256xf32>
    %17 = arith.addf %16, %13 : vector<6x256xf32>
    %c240_i32 = arith.constant 240 : i32
    %18 = tpu.dynamic_rotate %13 by %c240_i32 dim 1 : vector<6x256xf32>, i32 -> vector<6x256xf32>
    %19 = vector.broadcast %5 : vector<1x256xf32> to vector<6x256xf32>
    %20 = arith.mulf %19, %18 : vector<6x256xf32>
    %21 = arith.addf %17, %20 : vector<6x256xf32>
    %cst = arith.constant 1.800000e+01 : f32
    %22 = vector.broadcast %cst : f32 to vector<6x256xf32>
    %23 = arith.mulf %22, %0 : vector<6x256xf32>
    %cst_3 = arith.constant 2.000000e+00 : f32
    %24 = vector.broadcast %cst_3 : f32 to vector<6x256xf32>
    %25 = arith.mulf %24, %21 : vector<6x256xf32>
    %26 = arith.subf %23, %25 : vector<6x256xf32>
    %c0_4 = arith.constant 0 : index
    %c0_5 = arith.constant 0 : index
    %27 = vector.load %arg3[%c0_4, %c0_5] : memref<6x256xf32, #tpu.memory_space<vmem>>, vector<6x256xf32>
    tpu.vector_store %arg3[%c0_4, %c0_5], %26 {strides = array<i32>} : memref<6x256xf32, #tpu.memory_space<vmem>>, vector<6x256xf32>,
    return
  }
  func.func @transform_0(%arg0: i32) -> (i32, i32) {
    %c0_i32 = arith.constant 0 : i32
    %c0_i32_0 = arith.constant 0 : i32
    %c0_i32_1 = arith.constant 0 : i32
    return %c0_i32, %c0_i32_0 : i32, i32
  }
  func.func @transform_1(%arg0: i32) -> (i32, i32) {
    %c0_i32 = arith.constant 0 : i32
    %c0_i32_0 = arith.constant 0 : i32
    %c0_i32_1 = arith.constant 0 : i32
    return %c0_i32, %c0_i32_0 : i32, i32
  }
  func.func @transform_2(%arg0: i32) -> (i32, i32) {
    %c0_i32 = arith.constant 0 : i32
    %c0_i32_0 = arith.constant 0 : i32
    %c0_i32_1 = arith.constant 0 : i32
    return %c0_i32, %c0_i32_0 : i32, i32
  }
}

</mosaic_0001>

<llo_original>
// kernel: tpu_custom_call.1
$region0: #{tpu_custom_call.1}
  #allocation0 [shape = 'u32[]', space=smem, size = 0x4, offset = 0x4, fixed_abs, tag = 'smem constant byte address 0x4 - core index']
  #allocation1 [shape = 'u32[144,128]{1,0:T(1,128)}', space=vmem, size = 0x12000, scoped, tag = 'internal scratch']
  %s0 = inlined_call_operand.hbm [shape: f32[4,256], index: 0, kind: input, shape index: {}]
  %s1 = inlined_call_operand.hbm [shape: f32[6,256], index: 1, kind: input, shape index: {}]
  %s2 = inlined_call_operand.hbm [shape: f32[6,256], index: 2, kind: output, shape index: {}]
  %s3 = sld [smem:[#allocation0]]
  $region26: #{tpu_custom_call.1} parent=0
    _
  %s5 = ssub.s32 1, %s3
  %s6 = scalar_select 0, %s5, %s3
  $region1: #{tpu_custom_call.1} parent=0
    #allocation2 [shape = 'u8[4096]{0}', space=vmem, size = 0x1000, scoped, tag = 'input window, operand 0, single buffered']
    #allocation3 [shape = 's32[1]{0}', space=sflag, size = 0x4, scoped, tag = 'scoped memory for tpu_custom_call.1']
    #allocation4 [shape = 's32[1]{0}', space=sflag, size = 0x4, scoped, tag = 'scoped memory for tpu_custom_call.1']
    #allocation5 [shape = 'u8[8192]{0}', space=vmem, size = 0x2000, scoped, tag = 'input window, operand 1, single buffered']
    #allocation6 [shape = 's32[1]{0}', space=sflag, size = 0x4, scoped, tag = 'scoped memory for tpu_custom_call.1']
    #allocation7 [shape = 'u8[8192]{0}', space=vmem, size = 0x2000, scoped, tag = 'output window, operand 0, single buffered']
    %7 = vsyncpa [#allocation3], 0
    %8 = vsyncpa [#allocation6], 0
    %9 = vsyncpa [#allocation4], 0
    // Predicated region
    $region2: #{tpu_custom_call.1} parent=1 // pred_check
      _
    $region3: #{tpu_custom_call.1} parent=1 // pred_check_branch
      %11 = sbr.rel (0) target = $region5
    $region4: #{tpu_custom_call.1} parent=1 // pred_region
      %s13 = ssub.s32 128, 128
      %14 = vsyncadd [#allocation3], %s13
      %s16 = sshll.u32 [#allocation2], 4
      %s17 = int_to_ptr.vmem [resolvable:$true] %s16
      %19 = dma.hbm_to_vmem [thread:$0]  %s0, 128, %s17, [#allocation3]
    $region5: #{tpu_custom_call.1} parent=1 // pred_fallthru
      _
    // Predicated region
    $region6: #{tpu_custom_call.1} parent=1 // pred_check
      _
    $region7: #{tpu_custom_call.1} parent=1 // pred_check_branch
      %21 = sbr.rel (0) target = $region9
    $region8: #{tpu_custom_call.1} parent=1 // pred_region
      %s23 = ssub.s32 256, 256
      %24 = vsyncadd [#allocation6], %s23
      %s26 = sshll.u32 [#allocation5], 4
      %s27 = int_to_ptr.vmem [resolvable:$true] %s26
      %29 = dma.hbm_to_vmem [thread:$0]  %s1, 256, %s27, [#allocation6]
    $region9: #{tpu_custom_call.1} parent=1 // pred_fallthru
      _
    // Predicated region
    $region10: #{tpu_custom_call.1} parent=1 // pred_check
      _
    $region11: #{tpu_custom_call.1} parent=1 // pred_check_branch
      %31 = sbr.rel (0) target = $region13
    $region12: #{tpu_custom_call.1} parent=1 // pred_region
      %32 = dma.done [#allocation3], 128
    $region13: #{tpu_custom_call.1} parent=1 // pred_fallthru
      _
    // Predicated region
    $region14: #{tpu_custom_call.1} parent=1 // pred_check
      _
    $region15: #{tpu_custom_call.1} parent=1 // pred_check_branch
      %34 = sbr.rel (0) target = $region17
    $region16: #{tpu_custom_call.1} parent=1 // pred_region
      %35 = dma.done [#allocation6], 256
    $region17: #{tpu_custom_call.1} parent=1 // pred_fallthru
      _
    %v36 = vld [vmem:[#allocation5] sm:$0x3f]
    %v37 = vld [vmem:[#allocation5 + $0x8] sm:$0x3f]
    %v38 = vld [vmem:[#allocation2] sm:$0xff]
    %39 = vrot.lane.b32.xlu0 %v36, 1
    %v40 = vpop.permute.xlu0 %39
    %41 = vrot.lane.b32.xlu0 %v37, 1
    %v42 = vpop.permute.xlu0 %41
    %v43 = vlaneseq
    %v44 = vand.u32 %v43, 127
    %vm45 = vcmp.lt.s32.totalorder %v44, 1
    %v46 = vsel %vm45, %v40, %v42
    %v47 = vsel %vm45, %v42, %v40
    %v49 = vlaneseq
    %v50 = vshrl.u32 %v49, 7
    %v51 = vsub.s32 0, %v50
    %v52 = vrot.slane %v38, %v51
    %v53 = vlaneseq
    %v54 = vshrl.u32 %v53, 7
    %v55 = vsub.s32 4, %v54
    %v56 = vrot.slane %v38, %v55
    %v59 = vlaneseq
    %v60 = vshrl.u32 %v59, 7
    %v61 = vsub.s32 0, %v60
    %v62 = vrot.slane %v52, %v61
    %v63 = vlaneseq
    %v64 = vshrl.u32 %v63, 7
    %v65 = vsub.s32 0, %v64
    %v66 = vrot.slane %v56, %v65
    %v67 = vmul.f32 %v62, %v47
    %v68 = vmul.f32 %v66, %v46
    %v69 = vadd.f32 %v67, %v36
    %v70 = vadd.f32 %v68, %v37
    %71 = vrot.lane.b32.xlu0 %v36, 127
    %v72 = vpop.permute.xlu0 %71
    %73 = vrot.lane.b32.xlu0 %v37, 127
    %v74 = vpop.permute.xlu0 %73
    %vm75 = vcmp.lt.s32.totalorder %v44, 127
    %v76 = vsel %vm75, %v72, %v74
    %v77 = vsel %vm75, %v74, %v72
    %v78 = vlaneseq
    %v79 = vshrl.u32 %v78, 7
    %v80 = vsub.s32 1, %v79
    %v81 = vrot.slane %v38, %v80
    %v82 = vlaneseq
    %v83 = vshrl.u32 %v82, 7
    %v84 = vsub.s32 5, %v83
    %v85 = vrot.slane %v38, %v84
    %v88 = vlaneseq
    %v89 = vshrl.u32 %v88, 7
    %v90 = vsub.s32 1, %v89
    %v91 = vrot.slane %v81, %v90
    %v92 = vlaneseq
    %v93 = vshrl.u32 %v92, 7
    %v94 = vsub.s32 1, %v93
    %v95 = vrot.slane %v85, %v94
    %v96 = vmul.f32 %v91, %v76
    %v97 = vmul.f32 %v95, %v77
    %v98 = vadd.f32 %v69, %v96
    %v99 = vadd.f32 %v70, %v97
    %100 = vrot.lane.b32.xlu0 %v98, 16
    %v101 = vpop.permute.xlu0 %100
    %102 = vrot.lane.b32.xlu0 %v99, 16
    %v103 = vpop.permute.xlu0 %102
    %vm104 = vcmp.lt.s32.totalorder %v44, 16
    %v105 = vsel %vm104, %v101, %v103
    %v106 = vsel %vm104, %v103, %v101
    %v107 = vlaneseq
    %v108 = vshrl.u32 %v107, 7
    %v109 = vsub.s32 2, %v108
    %v110 = vrot.slane %v38, %v109
    %v111 = vlaneseq
    %v112 = vshrl.u32 %v111, 7
    %v113 = vsub.s32 6, %v112
    %v114 = vrot.slane %v38, %v113
    %v117 = vlaneseq
    %v118 = vshrl.u32 %v117, 7
    %v119 = vsub.s32 2, %v118
    %v120 = vrot.slane %v110, %v119
    %v121 = vlaneseq
    %v122 = vshrl.u32 %v121, 7
    %v123 = vsub.s32 2, %v122
    %v124 = vrot.slane %v114, %v123
    %v125 = vmul.f32 %v120, %v106
    %v126 = vmul.f32 %v124, %v105
    %v127 = vadd.f32 %v125, %v98
    %v128 = vadd.f32 %v126, %v99
    %129 = vrot.lane.b32.xlu0 %v98, 112
    %v130 = vpop.permute.xlu0 %129
    %131 = vrot.lane.b32.xlu0 %v99, 112
    %v132 = vpop.permute.xlu0 %131
    %vm133 = vcmp.lt.s32.totalorder %v44, 112
    %v134 = vsel %vm133, %v130, %v132
    %v135 = vsel %vm133, %v132, %v130
    %v136 = vlaneseq
    %v137 = vshrl.u32 %v136, 7
    %v138 = vsub.s32 3, %v137
    %v139 = vrot.slane %v38, %v138
    %v140 = vlaneseq
    %v141 = vshrl.u32 %v140, 7
    %v142 = vsub.s32 7, %v141
    %v143 = vrot.slane %v38, %v142
    %v146 = vlaneseq
    %v147 = vshrl.u32 %v146, 7
    %v148 = vsub.s32 3, %v147
    %v149 = vrot.slane %v139, %v148
    %v150 = vlaneseq
    %v151 = vshrl.u32 %v150, 7
    %v152 = vsub.s32 3, %v151
    %v153 = vrot.slane %v143, %v152
    %v154 = vmul.f32 %v149, %v134
    %v155 = vmul.f32 %v153, %v135
    %v156 = vadd.f32 %v127, %v154
    %v157 = vadd.f32 %v128, %v155
    %v158 = vmul.f32 %v36, 18.0
    %v159 = vmul.f32 %v37, 18.0
    %v160 = vmul.f32 %v156, 2.0
    %v161 = vmul.f32 %v157, 2.0
    %v162 = vsub.f32 %v158, %v160
    %v163 = vsub.f32 %v159, %v161
    %164 = vst [vmem:[#allocation7] sm:$0x3f] %v162
    %165 = vst [vmem:[#allocation7 + $0x8] sm:$0x3f] %v163
    // Predicated region
    $region18: #{tpu_custom_call.1} parent=1 // pred_check
      _
    $region19: #{tpu_custom_call.1} parent=1 // pred_check_branch
      %167 = sbr.rel (0) target = $region21
    $region20: #{tpu_custom_call.1} parent=1 // pred_region
      %s169 = ssub.s32 256, 256
      %170 = vsyncadd [#allocation4], %s169
      %s172 = sshll.u32 [#allocation7], 4
      %s173 = int_to_ptr.vmem [resolvable:$true] %s172
      %175 = dma.vmem_to_hbm [thread:$0]  %s173, 256, %s2, [#allocation4]
    $region21: #{tpu_custom_call.1} parent=1 // pred_fallthru
      _
    // Predicated region
    $region22: #{tpu_custom_call.1} parent=1 // pred_check
      _
    $region23: #{tpu_custom_call.1} parent=1 // pred_check_branch
      %177 = sbr.rel (0) target = $region25
    $region24: #{tpu_custom_call.1} parent=1 // pred_region
      %178 = dma.done [#allocation4], 256
    $region25: #{tpu_custom_call.1} parent=1 // pred_fallthru
      _
    %179 = vsyncpa [#allocation3], 1
    %180 = vsyncpa [#allocation6], 1
    %181 = vsyncpa [#allocation4], 1

</llo_original>
